<compile_context>
chip_gen: v5e
topology: v5e:2x2
jax: 0.10.0
libtpu: 0.0.40
codegen_flags: <defaults>
</compile_context>

<pallas_src>
import jax
import jax.numpy as jnp
from jax.experimental import pallas as pl
from jax.experimental.pallas import tpu as pltpu

_LANE = 128
_MIB = 1024 * 1024


def _round_up(n, m):
    return ((n + m - 1) // m) * m


def _is_v7x():
    try:
        return "v7" in jax.devices()[0].device_kind.lower()
    except Exception:
        return False


def _scale_mul_kernel(x_ref, e_ref, y_ref):
    # Pure broadcast multiply: e = exp(sign*scale) is precomputed (and cast to
    # the activation dtype) in the wrapper, so the hot loop is HBM streaming
    # plus one VALU multiply per element.
    y_ref[...] = x_ref[...] * e_ref[...]


def _run_scale_mul(x2d, e_row):
    """y = x2d * e_row with e_row broadcast over rows.

    x2d: (R, C) activations; e_row: (1, C), same dtype as x2d.
    """
    R, C = x2d.shape
    itemsize = jnp.dtype(x2d.dtype).itemsize
    sub = max(8, 32 // itemsize)  # sublane packing: 8 (f32) / 16 (bf16) / 32 (i8)

    v7x = _is_v7x()
    # x-in + y-out, each double buffered => 4 buffers of tb*C*itemsize bytes.
    # Target ~8 MiB/buffer on v7x (3.2 TB/s HBM, 64 MiB VMEM), ~4 MiB elsewhere.
    budget_bytes = (32 if v7x else 16) * _MIB
    vmem_limit = (48 if v7x else 32) * _MIB

    tb = budget_bytes // (4 * C * itemsize)
    tb = max(sub, (tb // sub) * sub)
    if v7x and R > sub:
        # Guarantee >=2 grid steps so the "parallel" axis shards across both
        # TensorCores (v5e/v6e have a single TC: do not shrink tiles there).
        tb = min(tb, max(sub, _round_up(pl.cdiv(R, 2), sub)))
    if tb >= R:
        tb = R  # single block equal to the full array dim (layout-exempt)
    grid = (pl.cdiv(R, tb),)

    cost = pl.CostEstimate(
        flops=R * C,
        transcendentals=0,  # exp hoisted to the wrapper
        bytes_accessed=2 * R * C * itemsize + C * itemsize,
    )

    return pl.pallas_call(
        _scale_mul_kernel,
        out_shape=jax.ShapeDtypeStruct((R, C), x2d.dtype),
        grid=grid,
        in_specs=[
            pl.BlockSpec((tb, C), lambda i: (i, 0)),
            # Constant block index: the (1, C) scale row stays resident.
            pl.BlockSpec((1, C), lambda i: (0, 0)),
        ],
        out_specs=pl.BlockSpec((tb, C), lambda i: (i, 0)),
        compiler_params=pltpu.CompilerParams(
            dimension_semantics=("parallel",),
            vmem_limit_bytes=vmem_limit,
        ),
        cost_estimate=cost,
    )(x2d, e_row)


def scaling_forward(x, scale, reverse=False):
    """Pallas wrapper reproducing Scaling.forward.

    Args:
        x:     (B, D) array.
        scale: (1, D) array (the learnable log-scale parameter).
        reverse: static Python bool, True for inference mode.
    Returns:
        (y, log_det_J) with y of x's shape/dtype, log_det_J a float32 scalar.
    """
    B, D = x.shape
    assert scale.shape == (1, D)
    sign = -1.0 if reverse else 1.0

    # Jacobian log-det depends only on `scale`: keep it out of the kernel.
    log_det_J = jnp.sum(scale.astype(jnp.float32)) + jnp.float32(1e-5)

    # exp(sign*scale): D-element op, computed once, cast once to x's dtype so
    # the kernel multiply/store stay at activation width.
    e = jnp.exp(sign * scale.astype(jnp.float32)).astype(x.dtype)

    if D % _LANE == 0:
        # Already lane-dense.
        y = _run_scale_mul(x, e)
    elif _LANE % D == 0 and (B * D) % _LANE == 0:
        # Free row-major re-tiling: (B, D) -> (B*D/128, 128); replicate the
        # (1, D) scale across 128/D lanes (tiny). Zero extra HBM traffic and
        # unmasked lane-dense stores.
        rep = _LANE // D
        x2 = x.reshape((B * D) // _LANE, _LANE)
        e2 = jnp.tile(e, (1, rep))
        y = _run_scale_mul(x2, e2).reshape(B, D)
    else:
        # Ragged D: run unpadded with block last-dim == full array dim
        # (masked stores beat two extra HBM pad/slice passes over x).
        y = _run_scale_mul(x, e)

    return y, log_det_J


if __name__ == "__main__":
    key = jax.random.PRNGKey(0)
    kx, ks, kx2, ks2 = jax.random.split(key, 4)

    # ---- D divides 128 (re-tiling path), f32, forward + reverse ----
    B, D = 8, 32
    x = jax.random.normal(kx, (B, D), dtype=jnp.float32)
    scale = 0.1 * jax.random.normal(ks, (1, D), dtype=jnp.float32)

    y_fwd, logdet_fwd = scaling_forward(x, scale, reverse=False)
    y_rev, logdet_rev = scaling_forward(x, scale, reverse=True)
    jax.block_until_ready((y_fwd, logdet_fwd, y_rev, logdet_rev))

    ref_fwd = x * jnp.exp(scale)
    ref_rev = x * jnp.exp(-scale)
    ref_ld = jnp.sum(scale) + 1e-5
    assert jnp.allclose(y_fwd, ref_fwd, rtol=1e-6, atol=1e-6)
    assert jnp.allclose(y_rev, ref_rev, rtol=1e-6, atol=1e-6)
    assert jnp.allclose(logdet_fwd, ref_ld, rtol=1e-6, atol=1e-6)
    assert jnp.allclose(logdet_rev, ref_ld, rtol=1e-6, atol=1e-6)

    # ---- bf16 activation path (multiply stays in bf16) ----
    x_bf16 = x.astype(jnp.bfloat16)
    y_bf16, _ = scaling_forward(x_bf16, scale, reverse=False)
    jax.block_until_ready(y_bf16)
    ref_bf16 = x_bf16.astype(jnp.float32) * jnp.exp(scale)
    assert jnp.allclose(y_bf16.astype(jnp.float32), ref_bf16, rtol=5e-2, atol=5e-2)

    # ---- ragged D (block last-dim == full D, masked stores) ----
    Br, Dr = 8, 48
    xr = jax.random.normal(kx2, (Br, Dr), dtype=jnp.float32)
    sr = 0.1 * jax.random.normal(ks2, (1, Dr), dtype=jnp.float32)
    yr, ldr = scaling_forward(xr, sr, reverse=False)
    jax.block_until_ready((yr, ldr))
    assert jnp.allclose(yr, xr * jnp.exp(sr), rtol=1e-6, atol=1e-6)
    assert jnp.allclose(ldr, jnp.sum(sr) + 1e-5, rtol=1e-6, atol=1e-6)

    # ---- D multiple of 128 (natively lane-dense) ----
    Bl, Dl = 16, 128
    xl = jax.random.normal(kx, (Bl, Dl), dtype=jnp.float32)
    sl = 0.1 * jax.random.normal(ks, (1, Dl), dtype=jnp.float32)
    yl, _ = scaling_forward(xl, sl, reverse=True)
    jax.block_until_ready(yl)
    assert jnp.allclose(yl, xl * jnp.exp(-sl), rtol=1e-6, atol=1e-6)

    print("KERNEL_OK")
</pallas_src>

<mosaic_0001>
module attributes {stable_mosaic.version = 11 : i64} {
  func.func @_scale_mul_kernel(%arg0: i32, %arg1: memref<2x128xf32, #tpu.memory_space<vmem>>, %arg2: memref<1x128xf32, #tpu.memory_space<vmem>>, %arg3: memref<2x128xf32, #tpu.memory_space<vmem>>) attributes {dimension_semantics = [#tpu.dimension_semantics<parallel>], iteration_bounds = array<i64: 1>, scalar_prefetch = 0 : i64, scratch_operands = 0 : i64, tpu.core_type = #tpu.core_type<tc>, window_params = [{transform_indices = @transform_0, window_bounds = array<i64: 2, 128>}, {pipeline_mode = #tpu.pipeline_mode<synchronous>, transform_indices = @transform_1, window_bounds = array<i64: 1, 128>}, {transform_indices = @transform_2, window_bounds = array<i64: 2, 128>}]} {
    %c0 = arith.constant 0 : index
    %c0_0 = arith.constant 0 : index
    %0 = vector.load %arg1[%c0, %c0_0] : memref<2x128xf32, #tpu.memory_space<vmem>>, vector<2x128xf32>
    %c0_1 = arith.constant 0 : index
    %c0_2 = arith.constant 0 : index
    %1 = vector.load %arg2[%c0_1, %c0_2] : memref<1x128xf32, #tpu.memory_space<vmem>>, vector<1x128xf32>
    %2 = vector.broadcast %1 : vector<1x128xf32> to vector<2x128xf32>
    %3 = arith.mulf %0, %2 : vector<2x128xf32>
    %c0_3 = arith.constant 0 : index
    %c0_4 = arith.constant 0 : index
    %4 = vector.load %arg3[%c0_3, %c0_4] : memref<2x128xf32, #tpu.memory_space<vmem>>, vector<2x128xf32>
    tpu.vector_store %arg3[%c0_3, %c0_4], %3 {strides = array<i32>} : memref<2x128xf32, #tpu.memory_space<vmem>>, vector<2x128xf32>,
    return
  }
  func.func @transform_0(%arg0: i32) -> (i32, i32) {
    %c0_i32 = arith.constant 0 : i32
    %c0_i32_0 = arith.constant 0 : i32
    return %arg0, %c0_i32 : i32, i32
  }
  func.func @transform_1(%arg0: i32) -> (i32, i32) {
    %c0_i32 = arith.constant 0 : i32
    %c0_i32_0 = arith.constant 0 : i32
    %c0_i32_1 = arith.constant 0 : i32
    return %c0_i32, %c0_i32_0 : i32, i32
  }
  func.func @transform_2(%arg0: i32) -> (i32, i32) {
    %c0_i32 = arith.constant 0 : i32
    %c0_i32_0 = arith.constant 0 : i32
    return %arg0, %c0_i32 : i32, i32
  }
}

</mosaic_0001>

<llo_original>
// kernel: tpu_custom_call.1
$region0: #{tpu_custom_call.1}
  #allocation0 [shape = 'u32[]', space=smem, size = 0x4, offset = 0x4, fixed_abs, tag = 'smem constant byte address 0x4 - core index']
  #allocation1 [shape = 'u32[72,128]{1,0:T(1,128)}', space=vmem, size = 0x9000, scoped, tag = 'internal scratch']
  %s0 = inlined_call_operand.hbm [shape: f32[2,128], index: 0, kind: input, shape index: {}]
  %s1 = inlined_call_operand.hbm [shape: f32[1,128], index: 1, kind: input, shape index: {}]
  %s2 = inlined_call_operand.hbm [shape: f32[2,128], index: 2, kind: output, shape index: {}]
  %s3 = sld [smem:[#allocation0]]
  $region26: #{tpu_custom_call.1} parent=0
    _
  %s5 = ssub.s32 1, %s3
  %s6 = scalar_select 0, %s5, %s3
  $region1: #{tpu_custom_call.1} parent=0
    #allocation2 [shape = 'u8[1024]{0}', space=vmem, size = 0x400, scoped, tag = 'input window, operand 0, single buffered']
    #allocation3 [shape = 's32[1]{0}', space=sflag, size = 0x4, scoped, tag = 'scoped memory for tpu_custom_call.1']
    #allocation4 [shape = 's32[1]{0}', space=sflag, size = 0x4, scoped, tag = 'scoped memory for tpu_custom_call.1']
    #allocation5 [shape = 'u8[512]{0}', space=vmem, size = 0x400, scoped, tag = 'input window, operand 1, single buffered']
    #allocation6 [shape = 's32[1]{0}', space=sflag, size = 0x4, scoped, tag = 'scoped memory for tpu_custom_call.1']
    #allocation7 [shape = 'u8[1024]{0}', space=vmem, size = 0x400, scoped, tag = 'output window, operand 0, single buffered']
    %7 = vsyncpa [#allocation3], 0
    %8 = vsyncpa [#allocation6], 0
    %9 = vsyncpa [#allocation4], 0
    // Predicated region
    $region2: #{tpu_custom_call.1} parent=1 // pred_check
      _
    $region3: #{tpu_custom_call.1} parent=1 // pred_check_branch
      %11 = sbr.rel (0) target = $region5
    $region4: #{tpu_custom_call.1} parent=1 // pred_region
      %13 = vsyncadd [#allocation3], 0
      %s15 = sshll.u32 %s0, 4
      %s16 = int_to_ptr.hbm [resolvable:$true] %s15
      %s17 = sshll.u32 [#allocation2], 4
      %s18 = int_to_ptr.vmem [resolvable:$true] %s17
      %20 = dma.hbm_to_vmem [thread:$0]  %s16, 32, %s18, [#allocation3]
    $region5: #{tpu_custom_call.1} parent=1 // pred_fallthru
      _
    // Predicated region
    $region6: #{tpu_custom_call.1} parent=1 // pred_check
      _
    $region7: #{tpu_custom_call.1} parent=1 // pred_check_branch
      %22 = sbr.rel (0) target = $region9
    $region8: #{tpu_custom_call.1} parent=1 // pred_region
      %24 = vsyncadd [#allocation6], 0
      %s26 = sshll.u32 %s1, 4
      %s27 = int_to_ptr.hbm [resolvable:$true] %s26
      %s28 = sshll.u32 [#allocation5], 4
      %s29 = int_to_ptr.vmem [resolvable:$true] %s28
      %31 = dma.hbm_to_vmem [thread:$0]  %s27, 16, %s29, [#allocation6]
    $region9: #{tpu_custom_call.1} parent=1 // pred_fallthru
      _
    // Predicated region
    $region10: #{tpu_custom_call.1} parent=1 // pred_check
      _
    $region11: #{tpu_custom_call.1} parent=1 // pred_check_branch
      %33 = sbr.rel (0) target = $region13
    $region12: #{tpu_custom_call.1} parent=1 // pred_region
      %35 = dma.done [#allocation3], 32
    $region13: #{tpu_custom_call.1} parent=1 // pred_fallthru
      _
    // Predicated region
    $region14: #{tpu_custom_call.1} parent=1 // pred_check
      _
    $region15: #{tpu_custom_call.1} parent=1 // pred_check_branch
      %37 = sbr.rel (0) target = $region17
    $region16: #{tpu_custom_call.1} parent=1 // pred_region
      %39 = dma.done [#allocation6], 16
    $region17: #{tpu_custom_call.1} parent=1 // pred_fallthru
      _
    %v40 = vld [vmem:[#allocation2] sm:$0x3]
    %v41 = vld [vmem:[#allocation5] sm:$0x1]
    %v43 = vperm.slane %v41, 0
    %v45 = vmul.f32 %v40, %v43
    %46 = vst [vmem:[#allocation7] sm:$0x3] %v45
    // Predicated region
    $region18: #{tpu_custom_call.1} parent=1 // pred_check
      _
    $region19: #{tpu_custom_call.1} parent=1 // pred_check_branch
      %48 = sbr.rel (0) target = $region21
    $region20: #{tpu_custom_call.1} parent=1 // pred_region
      %50 = vsyncadd [#allocation4], 0
      %s52 = sshll.u32 [#allocation7], 4
      %s53 = int_to_ptr.vmem [resolvable:$true] %s52
      %s54 = sshll.u32 %s2, 4
      %s55 = int_to_ptr.hbm [resolvable:$true] %s54
      %57 = dma.vmem_to_hbm [thread:$0]  %s53, 32, %s55, [#allocation4]
    $region21: #{tpu_custom_call.1} parent=1 // pred_fallthru
      _
    // Predicated region
    $region22: #{tpu_custom_call.1} parent=1 // pred_check
      _
    $region23: #{tpu_custom_call.1} parent=1 // pred_check_branch
      %59 = sbr.rel (0) target = $region25
    $region24: #{tpu_custom_call.1} parent=1 // pred_region
      %61 = dma.done [#allocation4], 32
    $region25: #{tpu_custom_call.1} parent=1 // pred_fallthru
      _
    %62 = vsyncpa [#allocation3], 1
    %63 = vsyncpa [#allocation6], 1
    %64 = vsyncpa [#allocation4], 1

</llo_original>
